<compile_context>
chip_gen: v7x
topology: tpu7x:2x2x1
jax: 0.10.0
libtpu: 0.0.40
codegen_flags: <defaults>
</compile_context>

<pallas_src>
import jax
import jax.numpy as jnp
from jax.experimental import pallas as pl
from jax.experimental.pallas import tpu as pltpu

LANES = 128   # lane-dense output width
KSIZE = 3     # conv kernel size
PAD = 1       # 'same' padding


def model_with_rescaler(x, params):
    """x: [N, C, H, W] float32 -> clamped rescaled scores [N, 2] float32."""
    N, C, H, W = x.shape
    chid = params["wc"].shape[0]
    hp = H + 2 * PAD
    kc = KSIZE * C
    th = 8 if H % 8 == 0 else H          # output rows per inner grid step (TH*W = 128 here)
    n_row_tiles = H // th
    inv_hw = 1.0 / float(H * W)

    # ---------- host-side layout prep (no 9x im2col; only a 3x width unfold) ----------
    xh = jnp.transpose(x, (0, 2, 3, 1))                                    # NCHW -> NHWC
    xp = jnp.pad(xh, ((0, 0), (PAD, PAD), (PAD, PAD), (0, 0)))             # [N, Hp, Wp, C]
    xw = jnp.stack([xp[:, :, dx:dx + W, :] for dx in range(KSIZE)], 3)     # [N, Hp, W, K, C]
    xw = xw.reshape(N, hp, W, kc).astype(jnp.bfloat16)                     # [N, Hp, W, K*C]

    # conv weight [Chid, C, kh, kw] -> per-dy matmul operand [kh, kw*C, Chid], bf16
    wc = jnp.transpose(params["wc"], (2, 3, 1, 0)).reshape(KSIZE, kc, chid)
    wc = wc.astype(jnp.bfloat16)
    bc = params["bc"].reshape(1, chid).astype(jnp.float32)

    # fold the (frozen) rescaler into the linear head: y = clip(pooled @ wf' + bf', 0, 1)
    rng = params["max_val"] - params["min_val"]
    inv = 1.0 / jnp.maximum(rng, 1e-12)          # eps guard: raw module would emit inf/NaN
    wh2 = params["wf"] * inv[None, :]                                      # [Chid, 2]
    bh2 = (params["bf"] - params["min_val"]) * inv                         # [2]
    wh = jnp.zeros((chid, LANES), jnp.float32).at[:, :2].set(wh2)          # lane-dense pad
    bh = jnp.zeros((1, LANES), jnp.float32).at[0, :2].set(bh2)

    def kernel(xw_ref, wc_ref, bc_ref, wh_ref, bh_ref, out_ref, pool_acc):
        t = pl.program_id(1)

        # 3x3 conv on this row tile: 3 dy-shifted reads, each a bf16 [TH*W, K*C] @ [K*C, Chid]
        # MXU matmul accumulated in f32.
        acc = jnp.zeros((th * W, chid), jnp.float32)
        for dy in range(KSIZE):                                   # static unroll (3 matmuls)
            win = xw_ref[0, pl.ds(t * th + dy, th), :, :]         # [TH, W, K*C] bf16
            acc += jnp.dot(win.reshape(th * W, kc), wc_ref[dy],
                           preferred_element_type=jnp.float32)
        conv = jnp.maximum(acc + bc_ref[...], 0.0)                # bias + ReLU (f32)

        # global average pool: per-image channel sums accumulated across row tiles
        @pl.when(t == 0)
        def _():
            pool_acc[...] = jnp.zeros_like(pool_acc)

        pool_acc[...] += jnp.sum(conv, axis=0, keepdims=True)     # [1, Chid]

        # last row tile of this image: linear head (rescaler pre-folded) + clamp
        @pl.when(t == pl.num_programs(1) - 1)
        def _():
            pooled = pool_acc[...] * inv_hw                       # [1, Chid]
            scores = jnp.dot(pooled, wh_ref[...],
                             preferred_element_type=jnp.float32) + bh_ref[...]
            out_ref[...] = jnp.clip(scores, 0.0, 1.0).reshape(1, 1, LANES)

    out = pl.pallas_call(
        kernel,
        out_shape=jax.ShapeDtypeStruct((N, 1, LANES), jnp.float32),
        grid_spec=pltpu.PrefetchScalarGridSpec(
            num_scalar_prefetch=0,
            grid=(N, n_row_tiles),
            in_specs=[
                pl.BlockSpec((1, hp, W, kc), lambda n, t: (n, 0, 0, 0)),   # padded activation
                pl.BlockSpec((KSIZE, kc, chid), lambda n, t: (0, 0, 0)),   # conv weight (bf16)
                pl.BlockSpec((1, chid), lambda n, t: (0, 0)),              # conv bias
                pl.BlockSpec((chid, LANES), lambda n, t: (0, 0)),          # folded head weight
                pl.BlockSpec((1, LANES), lambda n, t: (0, 0)),             # folded head bias
            ],
            out_specs=pl.BlockSpec((1, 1, LANES), lambda n, t: (n, 0, 0)),
            scratch_shapes=[pltpu.VMEM((1, chid), jnp.float32)],           # pooled-sum acc
        ),
        compiler_params=pltpu.CompilerParams(
            dimension_semantics=("parallel", "arbitrary"),
            vmem_limit_bytes=32 * 1024 * 1024,
        ),
    )(xw, wc, bc, wh, bh)

    return out[:, 0, :2]                                          # [N, 2]


def reference_model(x, params):
    """Pure-JAX reference of the same forward pass (f32 throughout)."""
    conv = jax.lax.conv_general_dilated(
        x, params["wc"], window_strides=(1, 1), padding=((PAD, PAD), (PAD, PAD)),
        dimension_numbers=("NCHW", "OIHW", "NCHW"))
    conv = jnp.maximum(conv + params["bc"][None, :, None, None], 0.0)
    pooled = jnp.mean(conv, axis=(2, 3))                          # [N, Chid]
    logits = pooled @ params["wf"] + params["bf"][None, :]        # [N, 2]
    normalized = (logits - params["min_val"]) / (params["max_val"] - params["min_val"])
    return jnp.clip(normalized, 0.0, 1.0)


def init_params(key, c_in=4, c_hid=128, k=3):
    k1, k2, k3, k4 = jax.random.split(key, 4)
    wc = jax.random.normal(k1, (c_hid, c_in, k, k), jnp.float32) * 0.1   # torch [Cout,Cin,kh,kw]
    bc = jax.random.normal(k2, (c_hid,), jnp.float32) * 0.1
    wf = jax.random.normal(k3, (c_hid, 2), jnp.float32) * 0.1
    bf = jax.random.normal(k4, (2,), jnp.float32) * 0.1
    # Rescaler buffers: min_val = [0, 0]; max_val = synthetic 95th percentiles
    # (stats.percentile95_spoof / _live).
    min_val = jnp.zeros((2,), jnp.float32)
    max_val = jnp.array([3.0, 5.0], jnp.float32)
    return {"wc": wc, "bc": bc, "wf": wf, "bf": bf,
            "min_val": min_val, "max_val": max_val}


if __name__ == "__main__":
    key = jax.random.PRNGKey(0)
    kx, kp = jax.random.split(key)

    N, C, H, W = 2, 4, 16, 16
    x = jax.random.normal(kx, (N, C, H, W), jnp.float32)
    params = init_params(kp, c_in=C, c_hid=128, k=KSIZE)

    out = jax.block_until_ready(model_with_rescaler(x, params))
    ref = jax.block_until_ready(reference_model(x, params))

    assert out.shape == (N, 2) and out.dtype == jnp.float32
    assert bool(jnp.all(out >= 0.0)) and bool(jnp.all(out <= 1.0))
    assert bool(jnp.allclose(out, ref, atol=2e-2, rtol=0.0)), (out, ref)
    print("KERNEL_OK")
</pallas_src>

<mosaic_0001>
module attributes {stable_mosaic.version = 11 : i64} {
  func.func @kernel(%arg0: i32, %arg1: i32, %arg2: memref<1x18x16x12xbf16, #tpu.memory_space<vmem>>, %arg3: memref<3x12x128xbf16, #tpu.memory_space<vmem>>, %arg4: memref<1x128xf32, #tpu.memory_space<vmem>>, %arg5: memref<128x128xf32, #tpu.memory_space<vmem>>, %arg6: memref<1x128xf32, #tpu.memory_space<vmem>>, %arg7: memref<1x1x128xf32, #tpu.memory_space<vmem>>, %arg8: memref<1x128xf32, #tpu.memory_space<vmem>>) attributes {dimension_semantics = [#tpu.dimension_semantics<parallel>, #tpu.dimension_semantics<arbitrary>], iteration_bounds = array<i64: 2, 2>, scalar_prefetch = 0 : i64, scratch_operands = 1 : i64, tpu.core_type = #tpu.core_type<tc>, window_params = [{transform_indices = @transform_0, window_bounds = array<i64: 1, 18, 16, 12>}, {pipeline_mode = #tpu.pipeline_mode<synchronous>, transform_indices = @transform_1, window_bounds = array<i64: 3, 12, 128>}, {pipeline_mode = #tpu.pipeline_mode<synchronous>, transform_indices = @transform_2, window_bounds = array<i64: 1, 128>}, {pipeline_mode = #tpu.pipeline_mode<synchronous>, transform_indices = @transform_3, window_bounds = array<i64: 128, 128>}, {pipeline_mode = #tpu.pipeline_mode<synchronous>, transform_indices = @transform_4, window_bounds = array<i64: 1, 128>}, {transform_indices = @transform_5, window_bounds = array<i64: 1, 1, 128>}]} {
    %cst = arith.constant 0.000000e+00 : f32
    %0 = vector.broadcast %cst : f32 to vector<128x128xf32>
    %c8_i32 = arith.constant 8 : i32
    %1 = arith.muli %arg1, %c8_i32 : i32
    %c0_i32 = arith.constant 0 : i32
    %2 = arith.addi %1, %c0_i32 : i32
    %c0 = arith.constant 0 : index
    %3 = arith.index_cast %2 : i32 to index
    %c0_0 = arith.constant 0 : index
    %c0_1 = arith.constant 0 : index
    %4 = vector.load %arg2[%c0, %3, %c0_0, %c0_1] : memref<1x18x16x12xbf16, #tpu.memory_space<vmem>>, vector<1x8x16x12xbf16>
    %5 = vector.shape_cast %4 : vector<1x8x16x12xbf16> to vector<8x16x12xbf16>
    %6 = vector.shape_cast %5 : vector<8x16x12xbf16> to vector<128x12xbf16>
    %c0_2 = arith.constant 0 : index
    %c0_3 = arith.constant 0 : index
    %c0_4 = arith.constant 0 : index
    %7 = vector.load %arg3[%c0_2, %c0_3, %c0_4] : memref<3x12x128xbf16, #tpu.memory_space<vmem>>, vector<1x12x128xbf16>
    %8 = vector.shape_cast %7 : vector<1x12x128xbf16> to vector<12x128xbf16>
    %cst_5 = arith.constant dense<0.000000e+00> : vector<128x128xf32>
    %9 = tpu.matmul %6, %8, %cst_5 {dimension_numbers = #tpu.dot_dimension_numbers<[1], [0], [0], [1], [0, 0, 1, 1], [], []>} : vector<128x12xbf16>, vector<12x128xbf16>, vector<128x128xf32> -> vector<128x128xf32>
    %10 = arith.addf %0, %9 : vector<128x128xf32>
    %c8_i32_6 = arith.constant 8 : i32
    %11 = arith.muli %arg1, %c8_i32_6 : i32
    %c1_i32 = arith.constant 1 : i32
    %12 = arith.addi %11, %c1_i32 : i32
    %c0_7 = arith.constant 0 : index
    %13 = arith.index_cast %12 : i32 to index
    %c0_8 = arith.constant 0 : index
    %c0_9 = arith.constant 0 : index
    %14 = vector.load %arg2[%c0_7, %13, %c0_8, %c0_9] : memref<1x18x16x12xbf16, #tpu.memory_space<vmem>>, vector<1x8x16x12xbf16>
    %15 = vector.shape_cast %14 : vector<1x8x16x12xbf16> to vector<8x16x12xbf16>
    %16 = vector.shape_cast %15 : vector<8x16x12xbf16> to vector<128x12xbf16>
    %c1 = arith.constant 1 : index
    %c0_10 = arith.constant 0 : index
    %c0_11 = arith.constant 0 : index
    %17 = vector.load %arg3[%c1, %c0_10, %c0_11] : memref<3x12x128xbf16, #tpu.memory_space<vmem>>, vector<1x12x128xbf16>
    %18 = vector.shape_cast %17 : vector<1x12x128xbf16> to vector<12x128xbf16>
    %cst_12 = arith.constant dense<0.000000e+00> : vector<128x128xf32>
    %19 = tpu.matmul %16, %18, %cst_12 {dimension_numbers = #tpu.dot_dimension_numbers<[1], [0], [0], [1], [0, 0, 1, 1], [], []>} : vector<128x12xbf16>, vector<12x128xbf16>, vector<128x128xf32> -> vector<128x128xf32>
    %20 = arith.addf %10, %19 : vector<128x128xf32>
    %c8_i32_13 = arith.constant 8 : i32
    %21 = arith.muli %arg1, %c8_i32_13 : i32
    %c2_i32 = arith.constant 2 : i32
    %22 = arith.addi %21, %c2_i32 : i32
    %c0_14 = arith.constant 0 : index
    %23 = arith.index_cast %22 : i32 to index
    %c0_15 = arith.constant 0 : index
    %c0_16 = arith.constant 0 : index
    %24 = vector.load %arg2[%c0_14, %23, %c0_15, %c0_16] : memref<1x18x16x12xbf16, #tpu.memory_space<vmem>>, vector<1x8x16x12xbf16>
    %25 = vector.shape_cast %24 : vector<1x8x16x12xbf16> to vector<8x16x12xbf16>
    %26 = vector.shape_cast %25 : vector<8x16x12xbf16> to vector<128x12xbf16>
    %c2 = arith.constant 2 : index
    %c0_17 = arith.constant 0 : index
    %c0_18 = arith.constant 0 : index
    %27 = vector.load %arg3[%c2, %c0_17, %c0_18] : memref<3x12x128xbf16, #tpu.memory_space<vmem>>, vector<1x12x128xbf16>
    %28 = vector.shape_cast %27 : vector<1x12x128xbf16> to vector<12x128xbf16>
    %cst_19 = arith.constant dense<0.000000e+00> : vector<128x128xf32>
    %29 = tpu.matmul %26, %28, %cst_19 {dimension_numbers = #tpu.dot_dimension_numbers<[1], [0], [0], [1], [0, 0, 1, 1], [], []>} : vector<128x12xbf16>, vector<12x128xbf16>, vector<128x128xf32> -> vector<128x128xf32>
    %30 = arith.addf %20, %29 : vector<128x128xf32>
    %c0_20 = arith.constant 0 : index
    %c0_21 = arith.constant 0 : index
    %31 = vector.load %arg4[%c0_20, %c0_21] : memref<1x128xf32, #tpu.memory_space<vmem>>, vector<1x128xf32>
    %32 = vector.broadcast %31 : vector<1x128xf32> to vector<128x128xf32>
    %33 = arith.addf %30, %32 : vector<128x128xf32>
    %cst_22 = arith.constant 0.000000e+00 : f32
    %34 = vector.broadcast %cst_22 : f32 to vector<128x128xf32>
    %35 = arith.maximumf %33, %34 : vector<128x128xf32>
    %c0_i32_23 = arith.constant 0 : i32
    %36 = arith.cmpi eq, %arg1, %c0_i32_23 : i32
    %37 = arith.extui %36 : i1 to i32
    %c0_i32_24 = arith.constant 0 : i32
    %38 = arith.cmpi ne, %37, %c0_i32_24 : i32
    scf.if %38 {
      %cst_32 = arith.constant 0.000000e+00 : f32
      %47 = vector.broadcast %cst_32 : f32 to vector<1x128xf32>
      %c0_33 = arith.constant 0 : index
      %c0_34 = arith.constant 0 : index
      %48 = vector.load %arg8[%c0_33, %c0_34] : memref<1x128xf32, #tpu.memory_space<vmem>>, vector<1x128xf32>
      tpu.vector_store %arg8[%c0_33, %c0_34], %47 {strides = array<i32>} : memref<1x128xf32, #tpu.memory_space<vmem>>, vector<1x128xf32>,
    } else {
    }
    %c0_25 = arith.constant 0 : index
    %c0_26 = arith.constant 0 : index
    %39 = vector.load %arg8[%c0_25, %c0_26] : memref<1x128xf32, #tpu.memory_space<vmem>>, vector<1x128xf32>
    %cst_27 = arith.constant dense<0.000000e+00> : vector<128xf32>
    %40 = vector.multi_reduction <add>, %35, %cst_27 [0] : vector<128x128xf32> to vector<128xf32>
    %41 = vector.shape_cast %40 : vector<128xf32> to vector<1x128xf32>
    %42 = arith.addf %39, %41 : vector<1x128xf32>
    %c0_28 = arith.constant 0 : index
    %c0_29 = arith.constant 0 : index
    %43 = vector.load %arg8[%c0_28, %c0_29] : memref<1x128xf32, #tpu.memory_space<vmem>>, vector<1x128xf32>
    tpu.vector_store %arg8[%c0_28, %c0_29], %42 {strides = array<i32>} : memref<1x128xf32, #tpu.memory_space<vmem>>, vector<1x128xf32>,
    %c1_i32_30 = arith.constant 1 : i32
    %44 = arith.cmpi eq, %arg1, %c1_i32_30 : i32
    %45 = arith.extui %44 : i1 to i32
    %c0_i32_31 = arith.constant 0 : i32
    %46 = arith.cmpi ne, %45, %c0_i32_31 : i32
    scf.if %46 {
      %c0_32 = arith.constant 0 : index
      %c0_33 = arith.constant 0 : index
      %47 = vector.load %arg8[%c0_32, %c0_33] : memref<1x128xf32, #tpu.memory_space<vmem>>, vector<1x128xf32>
      %cst_34 = arith.constant 3.906250e-03 : f32
      %48 = vector.broadcast %cst_34 : f32 to vector<1x128xf32>
      %49 = arith.mulf %47, %48 : vector<1x128xf32>
      %c0_35 = arith.constant 0 : index
      %c0_36 = arith.constant 0 : index
      %50 = vector.load %arg5[%c0_35, %c0_36] : memref<128x128xf32, #tpu.memory_space<vmem>>, vector<128x128xf32>
      %cst_37 = arith.constant dense<0.000000e+00> : vector<1x128xf32>
      %51 = tpu.matmul %49, %50, %cst_37 {dimension_numbers = #tpu.dot_dimension_numbers<[1], [0], [0], [1], [0, 0, 1, 1], [], []>} : vector<1x128xf32>, vector<128x128xf32>, vector<1x128xf32> -> vector<1x128xf32>
      %c0_38 = arith.constant 0 : index
      %c0_39 = arith.constant 0 : index
      %52 = vector.load %arg6[%c0_38, %c0_39] : memref<1x128xf32, #tpu.memory_space<vmem>>, vector<1x128xf32>
      %53 = arith.addf %51, %52 : vector<1x128xf32>
      %cst_40 = arith.constant 0.000000e+00 : f32
      %cst_41 = arith.constant 1.000000e+00 : f32
      %54 = vector.broadcast %cst_40 : f32 to vector<1x128xf32>
      %55 = arith.maximumf %54, %53 : vector<1x128xf32>
      %56 = vector.broadcast %cst_41 : f32 to vector<1x128xf32>
      %57 = arith.minimumf %56, %55 : vector<1x128xf32>
      %58 = vector.shape_cast %57 : vector<1x128xf32> to vector<1x1x128xf32>
      %c0_42 = arith.constant 0 : index
      %c0_43 = arith.constant 0 : index
      %c0_44 = arith.constant 0 : index
      %59 = vector.load %arg7[%c0_42, %c0_43, %c0_44] : memref<1x1x128xf32, #tpu.memory_space<vmem>>, vector<1x1x128xf32>
      tpu.vector_store %arg7[%c0_42, %c0_43, %c0_44], %58 {strides = array<i32>} : memref<1x1x128xf32, #tpu.memory_space<vmem>>, vector<1x1x128xf32>,
    } else {
    }
    return
  }
  func.func @transform_0(%arg0: i32, %arg1: i32) -> (i32, i32, i32, i32) {
    %c0_i32 = arith.constant 0 : i32
    %c0_i32_0 = arith.constant 0 : i32
    %c0_i32_1 = arith.constant 0 : i32
    %c0_i32_2 = arith.constant 0 : i32
    return %arg0, %c0_i32, %c0_i32_0, %c0_i32_1 : i32, i32, i32, i32
  }
  func.func @transform_1(%arg0: i32, %arg1: i32) -> (i32, i32, i32) {
    %c0_i32 = arith.constant 0 : i32
    %c0_i32_0 = arith.constant 0 : i32
    %c0_i32_1 = arith.constant 0 : i32
    %c0_i32_2 = arith.constant 0 : i32
    return %c0_i32, %c0_i32_0, %c0_i32_1 : i32, i32, i32
  }
  func.func @transform_2(%arg0: i32, %arg1: i32) -> (i32, i32) {
    %c0_i32 = arith.constant 0 : i32
    %c0_i32_0 = arith.constant 0 : i32
    %c0_i32_1 = arith.constant 0 : i32
    return %c0_i32, %c0_i32_0 : i32, i32
  }
  func.func @transform_3(%arg0: i32, %arg1: i32) -> (i32, i32) {
    %c0_i32 = arith.constant 0 : i32
    %c0_i32_0 = arith.constant 0 : i32
    %c0_i32_1 = arith.constant 0 : i32
    return %c0_i32, %c0_i32_0 : i32, i32
  }
  func.func @transform_4(%arg0: i32, %arg1: i32) -> (i32, i32) {
    %c0_i32 = arith.constant 0 : i32
    %c0_i32_0 = arith.constant 0 : i32
    %c0_i32_1 = arith.constant 0 : i32
    return %c0_i32, %c0_i32_0 : i32, i32
  }
  func.func @transform_5(%arg0: i32, %arg1: i32) -> (i32, i32, i32) {
    %c0_i32 = arith.constant 0 : i32
    %c0_i32_0 = arith.constant 0 : i32
    %c0_i32_1 = arith.constant 0 : i32
    return %arg0, %c0_i32, %c0_i32_0 : i32, i32, i32
  }
}

</mosaic_0001>

<llo_original>
// kernel: tpu_custom_call.1
$region0: #{tpu_custom_call.1}
  #allocation0 [shape = 'u32[]', space=smem, size = 0x4, offset = 0x4, fixed_abs, tag = 'smem constant byte address 0x4 - core index']
  #allocation1 [shape = 'u32[144,128]{1,0:T(1,128)}', space=vmem, size = 0x12000, scoped, tag = 'internal scratch']
  #allocation2 [shape = 'f32[1,128]{1,0:T(1,128)}', space=vmem, size = 0x200, scoped, tag = 'scratch operand']
  %s0 = inlined_call_operand.vmem [shape: bf16[2,18,16,12], index: 0, kind: input, shape index: {}]
  %s1 = inlined_call_operand.vmem [shape: bf16[3,12,128], index: 1, kind: input, shape index: {}]
  %s2 = inlined_call_operand.vmem [shape: f32[1,128], index: 2, kind: input, shape index: {}]
  %s3 = inlined_call_operand.vmem [shape: f32[128,128], index: 3, kind: input, shape index: {}]
  %s4 = inlined_call_operand.vmem [shape: f32[1,128], index: 4, kind: input, shape index: {}]
  %s5 = inlined_call_operand.hbm [shape: f32[2,1,128], index: 5, kind: output, shape index: {}]
  %s6 = sld [smem:[#allocation0]]
  $region61: #{tpu_custom_call.1} parent=0
    _
  %s8 = ssub.s32 1, %s6
  %s9 = scalar_select 0, %s8, %s6
  $region1: #{tpu_custom_call.1} parent=0
    #allocation3 [shape = 'u8[1024]{0}', space=vmem, size = 0x400, scoped, tag = 'output window, operand 0']
    #allocation4 [shape = 's32[2]{0}', space=sflag, size = 0x8, scoped, tag = 'scoped memory for tpu_custom_call.1']
    %10 = vsyncpa [#allocation4], 0
    %s11 = scalar_lea.sflag [#allocation4], 1
    %12 = vsyncpa %s11, 0
    loop: start=0, step=1, limit=6
    $region2: #{tpu_custom_call.1} parent=1 // loop_pre_header
      _
    $region3: #{tpu_custom_call.1} parent=1 // loop_header
      %s14 = sphi 0, %s18
      %p15 = scmp.ge.s32.totalorder %s14, 6
      %s21 = sphi 0, %s33
      %s22 = sphi 0, %s29
      %s23 = sphi 0, %s21
      %s24 = sphi 0, %s22
      %s25 = sphi 0, %s23
      %s26 = sphi 0, %s24
      %s36 = sphi 0, %s38
      %s39 = sphi 0, %s36
      %s40 = sphi 0, %s39
      %s56 = sphi 0, %s40
      %s60 = sphi 0, %s60
      %s62 = sphi 0, %s60
      %s63 = sphi 0, %s62
      %s77 = sphi 0, %s63
      %s81 = sphi 0, %s81
      %s83 = sphi 0, %s81
      %s84 = sphi 0, %s83
      %s98 = sphi 0, %s84
      %s102 = sphi 0, %s102
      %s104 = sphi 0, %s102
      %s105 = sphi 0, %s104
      %s119 = sphi 0, %s105
      %s123 = sphi 0, %s123
      %s125 = sphi 0, %s123
      %s126 = sphi 0, %s125
      %s140 = sphi 0, %s126
      %s146 = sphi 0, %s148
      %s149 = sphi 0, %s146
      %s150 = sphi 0, %s149
      %s166 = sphi 0, %s150
    $region4: #{tpu_custom_call.1} parent=1 // loop_header_branch
      %17 = sbr.rel (%p15) target = $region8
    $region5: #{tpu_custom_call.1} parent=1 // loop_body
      %s19 = ssub.s32 %s14, 1
      %s20 = ssub.s32 %s14, 2
      %s27 = sadd.s32 1, %s22
      %p28 = scmp.ge.s32.totalorder %s27, 2
      %s29 = scalar_select %p28, 0, %s27
      %s30 = sadd.s32 1, %s21
      %s31 = scalar_select %p28, %s30, %s21
      %p32 = scmp.ge.s32.totalorder %s31, 2
      %s33 = scalar_select %p32, 0, %s31
      %s34 = ssub.s32 %s21, %s33
      %p35 = scmp.eq.s32.totalorder %s34, 0
      %s37 = sadd.s32 %s36, 1
      %s38 = scalar_select %p35, %s36, %s37
      %p41 = pneg %p35
      %p42 = scmp.eq.s32.totalorder %s14, 3
      %p43 = por %p41, %p42
      %p44 = scmp.ne.s32.totalorder %s36, %s39
      %p45 = scmp.eq.s32.totalorder %s14, 0
      %p46 = por %p44, %p45
      %p47 = scmp.ne.s32.totalorder %s36, %s39
      %p48 = scmp.eq.s32.totalorder %s19, 3
      %p49 = por %p47, %p48
      %p50 = scmp.ne.s32.totalorder %s39, %s40
      %p51 = scmp.eq.s32.totalorder %s19, 0
      %p52 = por %p50, %p51
      %p53 = scmp.ne.s32.totalorder %s39, %s40
      %p54 = scmp.eq.s32.totalorder %s20, 3
      %p55 = por %p53, %p54
      %p57 = scmp.ne.s32.totalorder %s40, %s56
      %p58 = scmp.eq.s32.totalorder %s20, 0
      %p59 = por %p57, %p58
      %s61 = sadd.s32 %s60, 1
      %p64 = scmp.eq.s32.totalorder %s14, 3
      %p65 = scmp.ne.s32.totalorder %s60, %s62
      %p66 = scmp.eq.s32.totalorder %s14, 0
      %p67 = por %p65, %p66
      %p68 = scmp.ne.s32.totalorder %s60, %s62
      %p69 = scmp.eq.s32.totalorder %s19, 3
      %p70 = por %p68, %p69
      %p71 = scmp.ne.s32.totalorder %s62, %s63
      %p72 = scmp.eq.s32.totalorder %s19, 0
      %p73 = por %p71, %p72
      %p74 = scmp.ne.s32.totalorder %s62, %s63
      %p75 = scmp.eq.s32.totalorder %s20, 3
      %p76 = por %p74, %p75
      %p78 = scmp.ne.s32.totalorder %s63, %s77
      %p79 = scmp.eq.s32.totalorder %s20, 0
      %p80 = por %p78, %p79
      %s82 = sadd.s32 %s81, 1
      %p85 = scmp.eq.s32.totalorder %s14, 3
      %p86 = scmp.ne.s32.totalorder %s81, %s83
      %p87 = scmp.eq.s32.totalorder %s14, 0
      %p88 = por %p86, %p87
      %p89 = scmp.ne.s32.totalorder %s81, %s83
      %p90 = scmp.eq.s32.totalorder %s19, 3
      %p91 = por %p89, %p90
      %p92 = scmp.ne.s32.totalorder %s83, %s84
      %p93 = scmp.eq.s32.totalorder %s19, 0
      %p94 = por %p92, %p93
      %p95 = scmp.ne.s32.totalorder %s83, %s84
      %p96 = scmp.eq.s32.totalorder %s20, 3
      %p97 = por %p95, %p96
      %p99 = scmp.ne.s32.totalorder %s84, %s98
      %p100 = scmp.eq.s32.totalorder %s20, 0
      %p101 = por %p99, %p100
      %s103 = sadd.s32 %s102, 1
      %p106 = scmp.eq.s32.totalorder %s14, 3
      %p107 = scmp.ne.s32.totalorder %s102, %s104
      %p108 = scmp.eq.s32.totalorder %s14, 0
      %p109 = por %p107, %p108
      %p110 = scmp.ne.s32.totalorder %s102, %s104
      %p111 = scmp.eq.s32.totalorder %s19, 3
      %p112 = por %p110, %p111
      %p113 = scmp.ne.s32.totalorder %s104, %s105
      %p114 = scmp.eq.s32.totalorder %s19, 0
      %p115 = por %p113, %p114
      %p116 = scmp.ne.s32.totalorder %s104, %s105
      %p117 = scmp.eq.s32.totalorder %s20, 3
      %p118 = por %p116, %p117
      %p120 = scmp.ne.s32.totalorder %s105, %s119
      %p121 = scmp.eq.s32.totalorder %s20, 0
      %p122 = por %p120, %p121
      %s124 = sadd.s32 %s123, 1
      %p127 = scmp.eq.s32.totalorder %s14, 3
      %p128 = scmp.ne.s32.totalorder %s123, %s125
      %p129 = scmp.eq.s32.totalorder %s14, 0
      %p130 = por %p128, %p129
      %p131 = scmp.ne.s32.totalorder %s123, %s125
      %p132 = scmp.eq.s32.totalorder %s19, 3
      %p133 = por %p131, %p132
      %p134 = scmp.ne.s32.totalorder %s125, %s126
      %p135 = scmp.eq.s32.totalorder %s19, 0
      %p136 = por %p134, %p135
      %p137 = scmp.ne.s32.totalorder %s125, %s126
      %p138 = scmp.eq.s32.totalorder %s20, 3
      %p139 = por %p137, %p138
      %p141 = scmp.ne.s32.totalorder %s126, %s140
      %p142 = scmp.eq.s32.totalorder %s20, 0
      %p143 = por %p141, %p142
      %s144 = ssub.s32 %s21, %s33
      %p145 = scmp.eq.s32.totalorder %s144, 0
      %s147 = sadd.s32 %s146, 1
      %s148 = scalar_select %p145, %s146, %s147
      %p151 = pneg %p145
      %p152 = scmp.eq.s32.totalorder %s14, 3
      %p153 = por %p151, %p152
      %p154 = scmp.ne.s32.totalorder %s146, %s149
      %p155 = scmp.eq.s32.totalorder %s14, 0
      %p156 = por %p154, %p155
      %p157 = scmp.ne.s32.totalorder %s146, %s149
      %p158 = scmp.eq.s32.totalorder %s19, 3
      %p159 = por %p157, %p158
      %p160 = scmp.ne.s32.totalorder %s149, %s150
      %p161 = scmp.eq.s32.totalorder %s19, 0
      %p162 = por %p160, %p161
      %p163 = scmp.ne.s32.totalorder %s149, %s150
      %p164 = scmp.eq.s32.totalorder %s20, 3
      %p165 = por %p163, %p164
      %p167 = scmp.ne.s32.totalorder %s150, %s166
      %p168 = scmp.eq.s32.totalorder %s20, 0
      %p169 = por %p167, %p168
      %p170 = scmp.le.s32.totalorder 1, %s14
      %p171 = scmp.lt.s32.totalorder %s14, 5
      %p172 = pnand %p170, %p171
      %p173 = pneg %p172
      // Predicated region
      $region9: #{tpu_custom_call.1} parent=5 // pred_check
        _
      $region10: #{tpu_custom_call.1} parent=5 // pred_check_branch
        %175 = sbr.rel (%p172) target = $region12
      $region11: #{tpu_custom_call.1} parent=5 // pred_region
        %s176 = ssub.s32 %s14, 1
        // Predicated region
        $region13: #{tpu_custom_call.1} parent=11 // pred_check
          %p177 = pneg %p73
        $region14: #{tpu_custom_call.1} parent=11 // pred_check_branch
          %179 = sbr.rel (%p177) target = $region16
        $region15: #{tpu_custom_call.1} parent=11 // pred_region
          _
        $region16: #{tpu_custom_call.1} parent=11 // pred_fallthru
          _
        // Predicated region
        $region17: #{tpu_custom_call.1} parent=11 // pred_check
          %p180 = pneg %p94
        $region18: #{tpu_custom_call.1} parent=11 // pred_check_branch
          %182 = sbr.rel (%p180) target = $region20
        $region19: #{tpu_custom_call.1} parent=11 // pred_region
          _
        $region20: #{tpu_custom_call.1} parent=11 // pred_fallthru
          _
        // Predicated region
        $region21: #{tpu_custom_call.1} parent=11 // pred_check
          %p183 = pneg %p115
        $region22: #{tpu_custom_call.1} parent=11 // pred_check_branch
          %185 = sbr.rel (%p183) target = $region24
        $region23: #{tpu_custom_call.1} parent=11 // pred_region
          _
        $region24: #{tpu_custom_call.1} parent=11 // pred_fallthru
          _
        // Predicated region
        $region25: #{tpu_custom_call.1} parent=11 // pred_check
          %p186 = pneg %p136
        $region26: #{tpu_custom_call.1} parent=11 // pred_check_branch
          %188 = sbr.rel (%p186) target = $region28
        $region27: #{tpu_custom_call.1} parent=11 // pred_region
          _
        $region28: #{tpu_custom_call.1} parent=11 // pred_fallthru
          _
      $region12: #{tpu_custom_call.1} parent=5 // pred_fallthru
        _
      %p189 = scmp.lt.s32.totalorder %s14, 4
      // Predicated region
      $region29: #{tpu_custom_call.1} parent=5 // pred_check
        %p190 = pneg %p189
      $region30: #{tpu_custom_call.1} parent=5 // pred_check_branch
        %192 = sbr.rel (%p190) target = $region32
      $region31: #{tpu_custom_call.1} parent=5 // pred_region
        // Predicated region
        $region33: #{tpu_custom_call.1} parent=31 // pred_check
          %p193 = pneg %p46
        $region34: #{tpu_custom_call.1} parent=31 // pred_check_branch
          %195 = sbr.rel (%p193) target = $region36
        $region35: #{tpu_custom_call.1} parent=31 // pred_region
          %p196 = scmp.lt.s32.totalorder %s21, 1
          %s197 = scalar_select %p196, %s21, 1
          %s198 = smul.addr %s197, 36
          %s199 = smul.addr %s198, 4
          %s200 = scalar_lea.vmem %s0, %s199
        $region36: #{tpu_custom_call.1} parent=31 // pred_fallthru
          _
      $region32: #{tpu_custom_call.1} parent=5 // pred_fallthru
        _
      %p201 = scmp.le.s32.totalorder 1, %s14
      %p202 = scmp.lt.s32.totalorder %s14, 5
      %p203 = pnand %p201, %p202
      %p204 = pneg %p203
      // Predicated region
      $region37: #{tpu_custom_call.1} parent=5 // pred_check
        _
      $region38: #{tpu_custom_call.1} parent=5 // pred_check_branch
        %206 = sbr.rel (%p203) target = $region40
      $region39: #{tpu_custom_call.1} parent=5 // pred_region
        %s207 = ssub.s32 %s14, 1
        %p208 = scmp.lt.s32.totalorder %s23, 1
        %s209 = scalar_select %p208, %s23, 1
        %s210 = smul.addr %s209, 36
        %s211 = smul.addr %s210, 4
        %s212 = scalar_lea.vmem %s0, %s211
        %p213 = pneg %p52
        %p214 = pneg %p49
        %p215 = pneg %p73
        %p216 = pneg %p70
        %p217 = pneg %p94
        %p218 = pneg %p91
        %p219 = pneg %p115
        %p220 = pneg %p112
        %p221 = pneg %p136
        %p222 = pneg %p133
        %p223 = pneg %p162
        %p224 = pneg %p159
        %s225 = sand.u32 %s149, 1
        %s226 = scalar_lea.sflag [#allocation4], %s225
        %s227 = sand.u32 %s149, 1
        %s228 = scalar_lea.vmem [#allocation3], %s227
        %p229 = scmp.lt.s32.totalorder %s23, 1
        %s230 = scalar_select %p229, %s23, 1
        %s231 = smul.addr %s230, 36
        %s232 = smul.addr %s231, 4
        %s233 = scalar_lea.vmem %s0, %s232
        %s235 = smul.u32 %s24, 8
        %s236 = smul.u32 %s235, 2
        %s237 = smul.addr %s236, 4
        %s238 = scalar_lea.vmem %s233, %s237
        %v239 = vld [vmem:[%s238] sm:$0xf]
        %v240 = vld [vmem:[%s238 + $0x4] sm:$0xf]
        %v241 = vld [vmem:[%s238 + $0x8] sm:$0xf]
        %v242 = vld [vmem:[%s238 + $0xc] sm:$0xf]
        %v243 = vld [vmem:[%s238 + $0x10] sm:$0xf]
        %v244 = vld [vmem:[%s238 + $0x14] sm:$0xf]
        %v245 = vld [vmem:[%s238 + $0x18] sm:$0xf]
        %v246 = vld [vmem:[%s238 + $0x1c] sm:$0xf]
        %v247 = vld [vmem:[%s238 + $0x20] sm:$0xf]
        %v248 = vld [vmem:[%s238 + $0x24] sm:$0xf]
        %v249 = vld [vmem:[%s238 + $0x28] sm:$0xf]
        %v250 = vld [vmem:[%s238 + $0x2c] sm:$0xf]
        %v251 = vld [vmem:[%s238 + $0x30] sm:$0xf]
        %v252 = vld [vmem:[%s238 + $0x34] sm:$0xf]
        %v253 = vld [vmem:[%s238 + $0x38] sm:$0xf]
        %v254 = vld [vmem:[%s238 + $0x3c] sm:$0xf]
        %v255 = vld [vmem:[%s1] sm:$0xf]
        %v256 = vld [vmem:[%s1 + $0x4] sm:$0x3]
        %s257 = sadd.s32 %s235, 1
        %s258 = smul.u32 %s257, 2
        %s259 = smul.addr %s258, 4
        %s260 = scalar_lea.vmem %s233, %s259
        %v261 = vld [vmem:[%s260] sm:$0xf]
        %v262 = vld [vmem:[%s260 + $0x4] sm:$0xf]
        %v263 = vld [vmem:[%s260 + $0x8] sm:$0xf]
        %v264 = vld [vmem:[%s260 + $0xc] sm:$0xf]
        %v265 = vld [vmem:[%s260 + $0x10] sm:$0xf]
        %v266 = vld [vmem:[%s260 + $0x14] sm:$0xf]
        %v267 = vld [vmem:[%s260 + $0x18] sm:$0xf]
        %v268 = vld [vmem:[%s260 + $0x1c] sm:$0xf]
        %v269 = vld [vmem:[%s260 + $0x20] sm:$0xf]
        %v270 = vld [vmem:[%s260 + $0x24] sm:$0xf]
        %v271 = vld [vmem:[%s260 + $0x28] sm:$0xf]
        %v272 = vld [vmem:[%s260 + $0x2c] sm:$0xf]
        %v273 = vld [vmem:[%s260 + $0x30] sm:$0xf]
        %v274 = vld [vmem:[%s260 + $0x34] sm:$0xf]
        %v275 = vld [vmem:[%s260 + $0x38] sm:$0xf]
        %v276 = vld [vmem:[%s260 + $0x3c] sm:$0xf]
        %s277 = scalar_lea.vmem %s1, 8
        %v278 = vld [vmem:[%s277] sm:$0xf]
        %v279 = vld [vmem:[%s277 + $0x4] sm:$0x3]
        %v296 = vunpack.c.l.b16 %v261
        %v297 = vunpack.c.l.b16 %v262
        %v298 = vunpack.c.l.b16 %v263
        %v299 = vunpack.c.l.b16 %v264
        %v300 = vunpack.c.l.b16 %v265
        %v301 = vunpack.c.l.b16 %v266
        %v302 = vunpack.c.l.b16 %v267
        %v303 = vunpack.c.l.b16 %v268
        %v304 = vunpack.c.l.b16 %v269
        %v305 = vunpack.c.l.b16 %v270
        %v306 = vunpack.c.l.b16 %v271
        %v307 = vunpack.c.l.b16 %v272
        %v308 = vunpack.c.l.b16 %v273
        %v309 = vunpack.c.l.b16 %v274
        %v310 = vunpack.c.l.b16 %v275
        %v311 = vunpack.c.l.b16 %v276
        %v312 = vpack.c.b16 %v297, %v296
        %v313 = vpack.c.b16 %v299, %v298
        %v314 = vpack.c.b16 %v301, %v300
        %v315 = vpack.c.b16 %v303, %v302
        %v316 = vpack.c.b16 %v305, %v304
        %v317 = vpack.c.b16 %v307, %v306
        %v318 = vpack.c.b16 %v309, %v308
        %v319 = vpack.c.b16 %v311, %v310
        %v322 = vunpack.c.l.b16 %v278
        %v323 = vunpack.c.l.b16 %v279
        %v324 = vpack.c.b16 %v323, %v322
        %vm325 = vcmask 97280
        %v327 = vsel %vm325, %v312, 0
        %v330 = vsel %vm325, %v313, 0
        %v333 = vsel %vm325, %v314, 0
        %v336 = vsel %vm325, %v315, 0
        %v339 = vsel %vm325, %v316, 0
        %v342 = vsel %vm325, %v317, 0
        %v345 = vsel %vm325, %v318, 0
        %v348 = vsel %vm325, %v319, 0
        %vm350 = vcmask 1045504
        %v352 = vsel %vm350, %v324, 0
        %354 = vmatprep.subr.bf16.mxu0 0
        %355 = vmatpush1.bf16.msra.mxu0 %v352
        %356 = vmatprep.subr.bf16.mxu0 0
        %357 = vmatpush1.bf16.msra.mxu0 0
        %358 = vmatprep.subr.bf16.mxu0 0
        %359 = vmatpush1.bf16.msra.mxu0 0
        %360 = vmatprep.subr.bf16.mxu0 0
        %361 = vmatpush1.bf16.msra.mxu0 0
        %362 = vmatprep.subr.bf16.mxu0 0
        %363 = vmatpush1.bf16.msra.mxu0 0
        %364 = vmatprep.subr.bf16.mxu0 0
        %365 = vmatpush1.bf16.msra.mxu0 0
        %366 = vmatprep.subr.bf16.mxu0 0
        %367 = vmatpush1.bf16.msra.mxu0 0
        %368 = vmatprep.subr.bf16.mxu0 0
        %369 = vmatpush1.bf16.msra.mxu0 0
        %370 = vmatprep.subr.bf16.mxu0 0
        %371 = vmatpush1.bf16.msra.mxu0 0
        %372 = vmatprep.subr.bf16.mxu0 0
        %373 = vmatpush1.bf16.msra.mxu0 0
        %374 = vmatprep.subr.bf16.mxu0 0
        %375 = vmatpush1.bf16.msra.mxu0 0
        %376 = vmatprep.subr.bf16.mxu0 0
        %377 = vmatpush1.bf16.msra.mxu0 0
        %378 = vmatprep.subr.bf16.mxu0 0
        %379 = vmatpush1.bf16.msra.mxu0 0
        %380 = vmatprep.subr.bf16.mxu0 0
        %381 = vmatpush1.bf16.msra.mxu0 0
        %382 = vmatprep.subr.bf16.mxu0 0
        %383 = vmatpush1.bf16.msra.mxu0 0
        %384 = vmatprep.subr.bf16.mxu0 0
        %385 = vmatpush1.bf16.msra.mxu0 0
        %386 = vmatprep.mubr.bf16.mxu0 0
        %387 = vmatmul.mubr.bf16.gmra.mrb[0].mxu0 %v327
        %v388 = vpop.f32.mrb[0].mxu0
        %v389 = vadd.f32 0.0, %v388
        %v390 = vpop.f32.mrb[0].mxu0
        %v391 = vpop.f32.mrb[0].mxu0
        %v392 = vadd.f32 0.0, %v391
        %v393 = vpop.f32.mrb[0].mxu0
        %394 = vmatprep.mubr.bf16.mxu0 0
        %395 = vmatmul.mubr.bf16.gmra.mrb[0].mxu0 %v330
        %v396 = vpop.f32.mrb[0].mxu0
        %v397 = vadd.f32 0.0, %v396
        %v398 = vpop.f32.mrb[0].mxu0
        %v399 = vpop.f32.mrb[0].mxu0
        %v400 = vadd.f32 0.0, %v399
        %v401 = vpop.f32.mrb[0].mxu0
        %402 = vmatprep.mubr.bf16.mxu0 0
        %403 = vmatmul.mubr.bf16.gmra.mrb[0].mxu0 %v333
        %v404 = vpop.f32.mrb[0].mxu0
        %v405 = vadd.f32 0.0, %v404
        %v406 = vpop.f32.mrb[0].mxu0
        %v407 = vpop.f32.mrb[0].mxu0
        %v408 = vadd.f32 0.0, %v407
        %v409 = vpop.f32.mrb[0].mxu0
        %410 = vmatprep.mubr.bf16.mxu0 0
        %411 = vmatmul.mubr.bf16.gmra.mrb[0].mxu0 %v336
        %v412 = vpop.f32.mrb[0].mxu0
        %v413 = vadd.f32 0.0, %v412
        %v414 = vpop.f32.mrb[0].mxu0
        %v415 = vpop.f32.mrb[0].mxu0
        %v416 = vadd.f32 0.0, %v415
        %v417 = vpop.f32.mrb[0].mxu0
        %418 = vmatprep.mubr.bf16.mxu0 0
        %419 = vmatmul.mubr.bf16.gmra.mrb[0].mxu0 %v339
        %v420 = vpop.f32.mrb[0].mxu0
        %v421 = vadd.f32 0.0, %v420
        %v422 = vpop.f32.mrb[0].mxu0
        %v423 = vpop.f32.mrb[0].mxu0
        %v424 = vadd.f32 0.0, %v423
        %v425 = vpop.f32.mrb[0].mxu0
        %426 = vmatprep.mubr.bf16.mxu0 0
        %427 = vmatmul.mubr.bf16.gmra.mrb[0].mxu0 %v342
        %v428 = vpop.f32.mrb[0].mxu0
        %v429 = vadd.f32 0.0, %v428
        %v430 = vpop.f32.mrb[0].mxu0
        %v431 = vpop.f32.mrb[0].mxu0
        %v432 = vadd.f32 0.0, %v431
        %v433 = vpop.f32.mrb[0].mxu0
        %434 = vmatprep.mubr.bf16.mxu0 0
        %435 = vmatmul.mubr.bf16.gmra.mrb[0].mxu0 %v345
        %v436 = vpop.f32.mrb[0].mxu0
        %v437 = vadd.f32 0.0, %v436
        %v438 = vpop.f32.mrb[0].mxu0
        %v439 = vpop.f32.mrb[0].mxu0
        %v440 = vadd.f32 0.0, %v439
        %v441 = vpop.f32.mrb[0].mxu0
        %442 = vmatprep.mubr.bf16.mxu0 0
        %443 = vmatmul.mubr.bf16.gmra.mrb[0].mxu0 %v348
        %v444 = vpop.f32.mrb[0].mxu0
        %v445 = vadd.f32 0.0, %v444
        %v446 = vpop.f32.mrb[0].mxu0
        %v447 = vpop.f32.mrb[0].mxu0
        %v448 = vadd.f32 0.0, %v447
        %v449 = vpop.f32.mrb[0].mxu0
        %450 = vdwg.mxu0
        %v467 = vunpack.c.l.b16 %v239
        %v468 = vunpack.c.l.b16 %v240
        %v469 = vunpack.c.l.b16 %v241
        %v470 = vunpack.c.l.b16 %v242
        %v471 = vunpack.c.l.b16 %v243
        %v472 = vunpack.c.l.b16 %v244
        %v473 = vunpack.c.l.b16 %v245
        %v474 = vunpack.c.l.b16 %v246
        %v475 = vunpack.c.l.b16 %v247
        %v476 = vunpack.c.l.b16 %v248
        %v477 = vunpack.c.l.b16 %v249
        %v478 = vunpack.c.l.b16 %v250
        %v479 = vunpack.c.l.b16 %v251
        %v480 = vunpack.c.l.b16 %v252
        %v481 = vunpack.c.l.b16 %v253
        %v482 = vunpack.c.l.b16 %v254
        %v483 = vpack.c.b16 %v468, %v467
        %v484 = vpack.c.b16 %v470, %v469
        %v485 = vpack.c.b16 %v472, %v471
        %v486 = vpack.c.b16 %v474, %v473
        %v487 = vpack.c.b16 %v476, %v475
        %v488 = vpack.c.b16 %v478, %v477
        %v489 = vpack.c.b16 %v480, %v479
        %v490 = vpack.c.b16 %v482, %v481
        %v493 = vunpack.c.l.b16 %v255
        %v494 = vunpack.c.l.b16 %v256
        %v495 = vpack.c.b16 %v494, %v493
        %v497 = vsel %vm325, %v483, 0
        %v500 = vsel %vm325, %v484, 0
        %v503 = vsel %vm325, %v485, 0
        %v506 = vsel %vm325, %v486, 0
        %v509 = vsel %vm325, %v487, 0
        %v512 = vsel %vm325, %v488, 0
        %v515 = vsel %vm325, %v489, 0
        %v518 = vsel %vm325, %v490, 0
        %v521 = vsel %vm350, %v495, 0
        %523 = vmatprep.subr.bf16.mxu0 0
        %524 = vmatpush1.bf16.msra.mxu0 %v521
        %525 = vmatprep.subr.bf16.mxu0 0
        %526 = vmatpush1.bf16.msra.mxu0 0
        %527 = vmatprep.subr.bf16.mxu0 0
        %528 = vmatpush1.bf16.msra.mxu0 0
        %529 = vmatprep.subr.bf16.mxu0 0
        %530 = vmatpush1.bf16.msra.mxu0 0
        %531 = vmatprep.subr.bf16.mxu0 0
        %532 = vmatpush1.bf16.msra.mxu0 0
        %533 = vmatprep.subr.bf16.mxu0 0
        %534 = vmatpush1.bf16.msra.mxu0 0
        %535 = vmatprep.subr.bf16.mxu0 0
        %536 = vmatpush1.bf16.msra.mxu0 0
        %537 = vmatprep.subr.bf16.mxu0 0
        %538 = vmatpush1.bf16.msra.mxu0 0
        %539 = vmatprep.subr.bf16.mxu0 0
        %540 = vmatpush1.bf16.msra.mxu0 0
        %541 = vmatprep.subr.bf16.mxu0 0
        %542 = vmatpush1.bf16.msra.mxu0 0
        %543 = vmatprep.subr.bf16.mxu0 0
        %544 = vmatpush1.bf16.msra.mxu0 0
        %545 = vmatprep.subr.bf16.mxu0 0
        %546 = vmatpush1.bf16.msra.mxu0 0
        %547 = vmatprep.subr.bf16.mxu0 0
        %548 = vmatpush1.bf16.msra.mxu0 0
        %549 = vmatprep.subr.bf16.mxu0 0
        %550 = vmatpush1.bf16.msra.mxu0 0
        %551 = vmatprep.subr.bf16.mxu0 0
        %552 = vmatpush1.bf16.msra.mxu0 0
        %553 = vmatprep.subr.bf16.mxu0 0
        %554 = vmatpush1.bf16.msra.mxu0 0
        %555 = vmatprep.mubr.bf16.mxu0 0
        %556 = vmatmul.mubr.bf16.gmra.mrb[0].mxu0 %v497
        %v557 = vpop.f32.mrb[0].mxu0
        %v558 = vadd.f32 %v389, %v557
        %v559 = vpop.f32.mrb[0].mxu0
        %v560 = vpop.f32.mrb[0].mxu0
        %v561 = vadd.f32 %v392, %v560
        %v562 = vpop.f32.mrb[0].mxu0
        %563 = vmatprep.mubr.bf16.mxu0 0
        %564 = vmatmul.mubr.bf16.gmra.mrb[0].mxu0 %v500
        %v565 = vpop.f32.mrb[0].mxu0
        %v566 = vadd.f32 %v397, %v565
        %v567 = vpop.f32.mrb[0].mxu0
        %v568 = vpop.f32.mrb[0].mxu0
        %v569 = vadd.f32 %v400, %v568
        %v570 = vpop.f32.mrb[0].mxu0
        %571 = vmatprep.mubr.bf16.mxu0 0
        %572 = vmatmul.mubr.bf16.gmra.mrb[0].mxu0 %v503
        %v573 = vpop.f32.mrb[0].mxu0
        %v574 = vadd.f32 %v405, %v573
        %v575 = vpop.f32.mrb[0].mxu0
        %v576 = vpop.f32.mrb[0].mxu0
        %v577 = vadd.f32 %v408, %v576
        %v578 = vpop.f32.mrb[0].mxu0
        %579 = vmatprep.mubr.bf16.mxu0 0
        %580 = vmatmul.mubr.bf16.gmra.mrb[0].mxu0 %v506
        %v581 = vpop.f32.mrb[0].mxu0
        %v582 = vadd.f32 %v413, %v581
        %v583 = vpop.f32.mrb[0].mxu0
        %v584 = vpop.f32.mrb[0].mxu0
        %v585 = vadd.f32 %v416, %v584
        %v586 = vpop.f32.mrb[0].mxu0
        %587 = vmatprep.mubr.bf16.mxu0 0
        %588 = vmatmul.mubr.bf16.gmra.mrb[0].mxu0 %v509
        %v589 = vpop.f32.mrb[0].mxu0
        %v590 = vadd.f32 %v421, %v589
        %v591 = vpop.f32.mrb[0].mxu0
        %v592 = vpop.f32.mrb[0].mxu0
        %v593 = vadd.f32 %v424, %v592
        %v594 = vpop.f32.mrb[0].mxu0
        %595 = vmatprep.mubr.bf16.mxu0 0
        %596 = vmatmul.mubr.bf16.gmra.mrb[0].mxu0 %v512
        %v597 = vpop.f32.mrb[0].mxu0
        %v598 = vadd.f32 %v429, %v597
        %v599 = vpop.f32.mrb[0].mxu0
        %v600 = vpop.f32.mrb[0].mxu0
        %v601 = vadd.f32 %v432, %v600
        %v602 = vpop.f32.mrb[0].mxu0
        %603 = vmatprep.mubr.bf16.mxu0 0
        %604 = vmatmul.mubr.bf16.gmra.mrb[0].mxu0 %v515
        %v605 = vpop.f32.mrb[0].mxu0
        %v606 = vadd.f32 %v437, %v605
        %v607 = vpop.f32.mrb[0].mxu0
        %v608 = vpop.f32.mrb[0].mxu0
        %v609 = vadd.f32 %v440, %v608
        %v610 = vpop.f32.mrb[0].mxu0
        %611 = vmatprep.mubr.bf16.mxu0 0
        %612 = vmatmul.mubr.bf16.gmra.mrb[0].mxu0 %v518
        %v613 = vpop.f32.mrb[0].mxu0
        %v614 = vadd.f32 %v445, %v613
        %v615 = vpop.f32.mrb[0].mxu0
        %v616 = vpop.f32.mrb[0].mxu0
        %v617 = vadd.f32 %v448, %v616
        %v618 = vpop.f32.mrb[0].mxu0
        %619 = vdwg.mxu0
        %s620 = sadd.s32 %s235, 2
        %s621 = smul.u32 %s620, 2
        %s622 = smul.addr %s621, 4
        %s623 = scalar_lea.vmem %s233, %s622
        %v624 = vld [vmem:[%s623] sm:$0xf]
        %v625 = vld [vmem:[%s623 + $0x4] sm:$0xf]
        %v626 = vld [vmem:[%s623 + $0x8] sm:$0xf]
        %v627 = vld [vmem:[%s623 + $0xc] sm:$0xf]
        %v628 = vld [vmem:[%s623 + $0x10] sm:$0xf]
        %v629 = vld [vmem:[%s623 + $0x14] sm:$0xf]
        %v630 = vld [vmem:[%s623 + $0x18] sm:$0xf]
        %v631 = vld [vmem:[%s623 + $0x1c] sm:$0xf]
        %v632 = vld [vmem:[%s623 + $0x20] sm:$0xf]
        %v633 = vld [vmem:[%s623 + $0x24] sm:$0xf]
        %v634 = vld [vmem:[%s623 + $0x28] sm:$0xf]
        %v635 = vld [vmem:[%s623 + $0x2c] sm:$0xf]
        %v636 = vld [vmem:[%s623 + $0x30] sm:$0xf]
        %v637 = vld [vmem:[%s623 + $0x34] sm:$0xf]
        %v638 = vld [vmem:[%s623 + $0x38] sm:$0xf]
        %v639 = vld [vmem:[%s623 + $0x3c] sm:$0xf]
        %s640 = scalar_lea.vmem %s1, 16
        %v641 = vld [vmem:[%s640] sm:$0xf]
        %v642 = vld [vmem:[%s640 + $0x4] sm:$0x3]
        %v659 = vunpack.c.l.b16 %v624
        %v660 = vunpack.c.l.b16 %v625
        %v661 = vunpack.c.l.b16 %v626
        %v662 = vunpack.c.l.b16 %v627
        %v663 = vunpack.c.l.b16 %v628
        %v664 = vunpack.c.l.b16 %v629
        %v665 = vunpack.c.l.b16 %v630
        %v666 = vunpack.c.l.b16 %v631
        %v667 = vunpack.c.l.b16 %v632
        %v668 = vunpack.c.l.b16 %v633
        %v669 = vunpack.c.l.b16 %v634
        %v670 = vunpack.c.l.b16 %v635
        %v671 = vunpack.c.l.b16 %v636
        %v672 = vunpack.c.l.b16 %v637
        %v673 = vunpack.c.l.b16 %v638
        %v674 = vunpack.c.l.b16 %v639
        %v675 = vpack.c.b16 %v660, %v659
        %v676 = vpack.c.b16 %v662, %v661
        %v677 = vpack.c.b16 %v664, %v663
        %v678 = vpack.c.b16 %v666, %v665
        %v679 = vpack.c.b16 %v668, %v667
        %v680 = vpack.c.b16 %v670, %v669
        %v681 = vpack.c.b16 %v672, %v671
        %v682 = vpack.c.b16 %v674, %v673
        %v685 = vunpack.c.l.b16 %v641
        %v686 = vunpack.c.l.b16 %v642
        %v687 = vpack.c.b16 %v686, %v685
        %v689 = vsel %vm325, %v675, 0
        %v692 = vsel %vm325, %v676, 0
        %v695 = vsel %vm325, %v677, 0
        %v698 = vsel %vm325, %v678, 0
        %v701 = vsel %vm325, %v679, 0
        %v704 = vsel %vm325, %v680, 0
        %v707 = vsel %vm325, %v681, 0
        %v710 = vsel %vm325, %v682, 0
        %v713 = vsel %vm350, %v687, 0
        %715 = vmatprep.subr.bf16.mxu0 0
        %716 = vmatpush1.bf16.msra.mxu0 %v713
        %717 = vmatprep.subr.bf16.mxu0 0
        %718 = vmatpush1.bf16.msra.mxu0 0
        %719 = vmatprep.subr.bf16.mxu0 0
        %720 = vmatpush1.bf16.msra.mxu0 0
        %721 = vmatprep.subr.bf16.mxu0 0
        %722 = vmatpush1.bf16.msra.mxu0 0
        %723 = vmatprep.subr.bf16.mxu0 0
        %724 = vmatpush1.bf16.msra.mxu0 0
        %725 = vmatprep.subr.bf16.mxu0 0
        %726 = vmatpush1.bf16.msra.mxu0 0
        %727 = vmatprep.subr.bf16.mxu0 0
        %728 = vmatpush1.bf16.msra.mxu0 0
        %729 = vmatprep.subr.bf16.mxu0 0
        %730 = vmatpush1.bf16.msra.mxu0 0
        %731 = vmatprep.subr.bf16.mxu0 0
        %732 = vmatpush1.bf16.msra.mxu0 0
        %733 = vmatprep.subr.bf16.mxu0 0
        %734 = vmatpush1.bf16.msra.mxu0 0
        %735 = vmatprep.subr.bf16.mxu0 0
        %736 = vmatpush1.bf16.msra.mxu0 0
        %737 = vmatprep.subr.bf16.mxu0 0
        %738 = vmatpush1.bf16.msra.mxu0 0
        %739 = vmatprep.subr.bf16.mxu0 0
        %740 = vmatpush1.bf16.msra.mxu0 0
        %741 = vmatprep.subr.bf16.mxu0 0
        %742 = vmatpush1.bf16.msra.mxu0 0
        %743 = vmatprep.subr.bf16.mxu0 0
        %744 = vmatpush1.bf16.msra.mxu0 0
        %745 = vmatprep.subr.bf16.mxu0 0
        %746 = vmatpush1.bf16.msra.mxu0 0
        %747 = vmatprep.mubr.bf16.mxu0 0
        %748 = vmatmul.mubr.bf16.gmra.mrb[0].mxu0 %v689
        %v749 = vpop.f32.mrb[0].mxu0
        %v750 = vadd.f32 0.0, %v749
        %v751 = vpop.f32.mrb[0].mxu0
        %v752 = vpop.f32.mrb[0].mxu0
        %v753 = vadd.f32 0.0, %v752
        %v754 = vpop.f32.mrb[0].mxu0
        %755 = vmatprep.mubr.bf16.mxu0 0
        %756 = vmatmul.mubr.bf16.gmra.mrb[0].mxu0 %v692
        %v757 = vpop.f32.mrb[0].mxu0
        %v758 = vadd.f32 0.0, %v757
        %v759 = vpop.f32.mrb[0].mxu0
        %v760 = vpop.f32.mrb[0].mxu0
        %v761 = vadd.f32 0.0, %v760
        %v762 = vpop.f32.mrb[0].mxu0
        %763 = vmatprep.mubr.bf16.mxu0 0
        %764 = vmatmul.mubr.bf16.gmra.mrb[0].mxu0 %v695
        %v765 = vpop.f32.mrb[0].mxu0
        %v766 = vadd.f32 0.0, %v765
        %v767 = vpop.f32.mrb[0].mxu0
        %v768 = vpop.f32.mrb[0].mxu0
        %v769 = vadd.f32 0.0, %v768
        %v770 = vpop.f32.mrb[0].mxu0
        %771 = vmatprep.mubr.bf16.mxu0 0
        %772 = vmatmul.mubr.bf16.gmra.mrb[0].mxu0 %v698
        %v773 = vpop.f32.mrb[0].mxu0
        %v774 = vadd.f32 0.0, %v773
        %v775 = vpop.f32.mrb[0].mxu0
        %v776 = vpop.f32.mrb[0].mxu0
        %v777 = vadd.f32 0.0, %v776
        %v778 = vpop.f32.mrb[0].mxu0
        %779 = vmatprep.mubr.bf16.mxu0 0
        %780 = vmatmul.mubr.bf16.gmra.mrb[0].mxu0 %v701
        %v781 = vpop.f32.mrb[0].mxu0
        %v782 = vadd.f32 0.0, %v781
        %v783 = vpop.f32.mrb[0].mxu0
        %v784 = vpop.f32.mrb[0].mxu0
        %v785 = vadd.f32 0.0, %v784
        %v786 = vpop.f32.mrb[0].mxu0
        %787 = vmatprep.mubr.bf16.mxu0 0
        %788 = vmatmul.mubr.bf16.gmra.mrb[0].mxu0 %v704
        %v789 = vpop.f32.mrb[0].mxu0
        %v790 = vadd.f32 0.0, %v789
        %v791 = vpop.f32.mrb[0].mxu0
        %v792 = vpop.f32.mrb[0].mxu0
        %v793 = vadd.f32 0.0, %v792
        %v794 = vpop.f32.mrb[0].mxu0
        %795 = vmatprep.mubr.bf16.mxu0 0
        %796 = vmatmul.mubr.bf16.gmra.mrb[0].mxu0 %v707
        %v797 = vpop.f32.mrb[0].mxu0
        %v798 = vadd.f32 0.0, %v797
        %v799 = vpop.f32.mrb[0].mxu0
        %v800 = vpop.f32.mrb[0].mxu0
        %v801 = vadd.f32 0.0, %v800
        %v802 = vpop.f32.mrb[0].mxu0
        %803 = vmatprep.mubr.bf16.mxu0 0
        %804 = vmatmul.mubr.bf16.gmra.mrb[0].mxu0 %v710
        %v805 = vpop.f32.mrb[0].mxu0
        %v806 = vadd.f32 0.0, %v805
        %v807 = vpop.f32.mrb[0].mxu0
        %v808 = vpop.f32.mrb[0].mxu0
        %v809 = vadd.f32 0.0, %v808
        %v810 = vpop.f32.mrb[0].mxu0
        %811 = vdwg.mxu0
        %v812 = vadd.f32 %v558, %v750
        %v813 = vadd.f32 %v561, %v753
        %v814 = vadd.f32 %v566, %v758
        %v815 = vadd.f32 %v569, %v761
        %v816 = vadd.f32 %v574, %v766
        %v817 = vadd.f32 %v577, %v769
        %v818 = vadd.f32 %v582, %v774
        %v819 = vadd.f32 %v585, %v777
        %v820 = vadd.f32 %v590, %v782
        %v821 = vadd.f32 %v593, %v785
        %v822 = vadd.f32 %v598, %v790
        %v823 = vadd.f32 %v601, %v793
        %v824 = vadd.f32 %v606, %v798
        %v825 = vadd.f32 %v609, %v801
        %v826 = vadd.f32 %v614, %v806
        %v827 = vadd.f32 %v617, %v809
        %v828 = vld [vmem:[%s2] sm:$0x1]
        %v830 = vlaneseq
        %v831 = vshrl.u32 %v830, 7
        %v832 = vsub.s32 0, %v831
        %v833 = vrot.slane %v828, %v832
        %v835 = vadd.f32 %v812, %v833
        %v836 = vadd.f32 %v813, %v833
        %v837 = vadd.f32 %v814, %v833
        %v838 = vadd.f32 %v815, %v833
        %v839 = vadd.f32 %v816, %v833
        %v840 = vadd.f32 %v817, %v833
        %v841 = vadd.f32 %v818, %v833
        %v842 = vadd.f32 %v819, %v833
        %v843 = vadd.f32 %v820, %v833
        %v844 = vadd.f32 %v821, %v833
        %v845 = vadd.f32 %v822, %v833
        %v846 = vadd.f32 %v823, %v833
        %v847 = vadd.f32 %v824, %v833
        %v848 = vadd.f32 %v825, %v833
        %v849 = vadd.f32 %v826, %v833
        %v850 = vadd.f32 %v827, %v833
        %v851 = vmax.f32 %v835, 0.0
        %v852 = vmax.f32 %v836, 0.0
        %v853 = vmax.f32 %v837, 0.0
        %v854 = vmax.f32 %v838, 0.0
        %v855 = vmax.f32 %v839, 0.0
        %v856 = vmax.f32 %v840, 0.0
        %v857 = vmax.f32 %v841, 0.0
        %v858 = vmax.f32 %v842, 0.0
        %v859 = vmax.f32 %v843, 0.0
        %v860 = vmax.f32 %v844, 0.0
        %v861 = vmax.f32 %v845, 0.0
        %v862 = vmax.f32 %v846, 0.0
        %v863 = vmax.f32 %v847, 0.0
        %v864 = vmax.f32 %v848, 0.0
        %v865 = vmax.f32 %v849, 0.0
        %v866 = vmax.f32 %v850, 0.0
        %p867 = scmp.eq.s32.totalorder %s24, 0
        // Predicated region
        $region41: #{tpu_custom_call.1} parent=39 // pred_check
          %p868 = pneg %p867
        $region42: #{tpu_custom_call.1} parent=39 // pred_check_branch
          %870 = sbr.rel (%p868) target = $region44
        $region43: #{tpu_custom_call.1} parent=39 // pred_region
          %871 = vst [vmem:[#allocation2] sm:$0x1] 0.0
        $region44: #{tpu_custom_call.1} parent=39 // pred_fallthru
          _
        %v872 = vld [vmem:[#allocation2] sm:$0x1]
        %v873 = vadd.f32 %v851, %v852
        %v874 = vadd.f32 %v873, %v853
        %v875 = vadd.f32 %v874, %v854
        %v876 = vadd.f32 %v875, %v855
        %v877 = vadd.f32 %v876, %v856
        %v878 = vadd.f32 %v877, %v857
        %v879 = vadd.f32 %v878, %v858
        %v880 = vadd.f32 %v879, %v859
        %v881 = vadd.f32 %v880, %v860
        %v882 = vadd.f32 %v881, %v861
        %v883 = vadd.f32 %v882, %v862
        %v884 = vadd.f32 %v883, %v863
        %v885 = vadd.f32 %v884, %v864
        %v886 = vadd.f32 %v885, %v865
        %v887 = vadd.f32 %v886, %v866
        %v888 = vrot.slane %v887, 4
        %v889 = vadd.f32 %v887, %v888
        %v890 = vrot.slane %v889, 2
        %v891 = vadd.f32 %v889, %v890
        %v892 = vrot.slane %v891, 1
        %v893 = vadd.f32 %v891, %v892
        %v894 = vadd.f32 %v872, %v893
        %895 = vst [vmem:[#allocation2] sm:$0x1] %v894
        %p896 = scmp.eq.s32.totalorder %s24, 1
        // Predicated region
        $region45: #{tpu_custom_call.1} parent=39 // pred_check
          %p897 = pneg %p896
        $region46: #{tpu_custom_call.1} parent=39 // pred_check_branch
          %899 = sbr.rel (%p897) target = $region48
        $region47: #{tpu_custom_call.1} parent=39 // pred_region
          %v900 = vld [vmem:[#allocation2] sm:$0x1]
          %v901 = vmul.f32 %v900, 0.00390625
          %v902 = vld [vmem:[%s3] sm:$0xff]
          %v903 = vld [vmem:[%s3 + $0x8] sm:$0xff]
          %v904 = vld [vmem:[%s3 + $0x10] sm:$0xff]
          %v905 = vld [vmem:[%s3 + $0x18] sm:$0xff]
          %v906 = vld [vmem:[%s3 + $0x20] sm:$0xff]
          %v907 = vld [vmem:[%s3 + $0x28] sm:$0xff]
          %v908 = vld [vmem:[%s3 + $0x30] sm:$0xff]
          %v909 = vld [vmem:[%s3 + $0x38] sm:$0xff]
          %v910 = vld [vmem:[%s3 + $0x40] sm:$0xff]
          %v911 = vld [vmem:[%s3 + $0x48] sm:$0xff]
          %v912 = vld [vmem:[%s3 + $0x50] sm:$0xff]
          %v913 = vld [vmem:[%s3 + $0x58] sm:$0xff]
          %v914 = vld [vmem:[%s3 + $0x60] sm:$0xff]
          %v915 = vld [vmem:[%s3 + $0x68] sm:$0xff]
          %v916 = vld [vmem:[%s3 + $0x70] sm:$0xff]
          %v917 = vld [vmem:[%s3 + $0x78] sm:$0xff]
          %v918 = vld [vmem:[%s4] sm:$0x1]
          %919 = vmatprep.subr.mxu0 0.0
          %920 = vmatpush1.msra.mxu0 %v902
          %921 = vmatprep.subr.mxu0 0.0
          %922 = vmatpush1.msra.mxu0 %v903
          %923 = vmatprep.subr.mxu0 0.0
          %924 = vmatpush1.msra.mxu0 %v904
          %925 = vmatprep.subr.mxu0 0.0
          %926 = vmatpush1.msra.mxu0 %v905
          %927 = vmatprep.subr.mxu0 0.0
          %928 = vmatpush1.msra.mxu0 %v906
          %929 = vmatprep.subr.mxu0 0.0
          %930 = vmatpush1.msra.mxu0 %v907
          %931 = vmatprep.subr.mxu0 0.0
          %932 = vmatpush1.msra.mxu0 %v908
          %933 = vmatprep.subr.mxu0 0.0
          %934 = vmatpush1.msra.mxu0 %v909
          %935 = vmatprep.subr.mxu0 0.0
          %936 = vmatpush1.msra.mxu0 %v910
          %937 = vmatprep.subr.mxu0 0.0
          %938 = vmatpush1.msra.mxu0 %v911
          %939 = vmatprep.subr.mxu0 0.0
          %940 = vmatpush1.msra.mxu0 %v912
          %941 = vmatprep.subr.mxu0 0.0
          %942 = vmatpush1.msra.mxu0 %v913
          %943 = vmatprep.subr.mxu0 0.0
          %944 = vmatpush1.msra.mxu0 %v914
          %945 = vmatprep.subr.mxu0 0.0
          %946 = vmatpush1.msra.mxu0 %v915
          %947 = vmatprep.subr.mxu0 0.0
          %948 = vmatpush1.msra.mxu0 %v916
          %949 = vmatprep.subr.mxu0 0.0
          %950 = vmatpush1.msra.mxu0 %v917
          %951 = vmatprep.subr.mxu0 0.0
          %952 = vmatpush1.msra.mxu0 0.0
          %953 = vmatprep.subr.mxu0 0.0
          %954 = vmatpush1.msra.mxu0 0.0
          %955 = vmatprep.subr.mxu0 0.0
          %956 = vmatpush1.msra.mxu0 0.0
          %957 = vmatprep.subr.mxu0 0.0
          %958 = vmatpush1.msra.mxu0 0.0
          %959 = vmatprep.subr.mxu0 0.0
          %960 = vmatpush1.msra.mxu0 0.0
          %961 = vmatprep.subr.mxu0 0.0
          %962 = vmatpush1.msra.mxu0 0.0
          %963 = vmatprep.subr.mxu0 0.0
          %964 = vmatpush1.msra.mxu0 0.0
          %965 = vmatprep.subr.mxu0 0.0
          %966 = vmatpush1.msra.mxu0 0.0
          %967 = vmatprep.subr.mxu0 0.0
          %968 = vmatpush1.msra.mxu0 0.0
          %969 = vmatprep.subr.mxu0 0.0
          %970 = vmatpush1.msra.mxu0 0.0
          %971 = vmatprep.subr.mxu0 0.0
          %972 = vmatpush1.msra.mxu0 0.0
          %973 = vmatprep.subr.mxu0 0.0
          %974 = vmatpush1.msra.mxu0 0.0
          %975 = vmatprep.subr.mxu0 0.0
          %976 = vmatpush1.msra.mxu0 0.0
          %977 = vmatprep.subr.mxu0 0.0
          %978 = vmatpush1.msra.mxu0 0.0
          %979 = vmatprep.subr.mxu0 0.0
          %980 = vmatpush1.msra.mxu0 0.0
          %981 = vmatprep.subr.mxu0 0.0
          %982 = vmatpush1.msra.mxu0 0.0
          %983 = vmatprep.mubr.f32.mxu0 0.0
          %984 = vmatmul.mubr.f32.gmra.mrb[0].mxu0 %v901
          %v985 = vpop.f32.mrb[0].mxu0
          %v986 = vadd.f32 %v918, %v985
          %v987 = vpop.f32.mrb[0].mxu0
          %988 = vdwg.mxu0
          %v989 = vmax.f32 %v986, 0.0
          %v990 = vmin.f32 %v989, 1.0
          %991 = vst [vmem:[%s228] sm:$0x1] %v990
        $region48: #{tpu_custom_call.1} parent=39 // pred_fallthru
          _
        %s992 = sand.u32 %s149, 1
        %s993 = scalar_lea.sflag [#allocation4], %s992
        %s994 = sand.u32 %s149, 1
        %s995 = scalar_lea.vmem [#allocation3], %s994
        // Predicated region
        $region49: #{tpu_custom_call.1} parent=39 // pred_check
          %p996 = pneg %p159
        $region50: #{tpu_custom_call.1} parent=39 // pred_check_branch
          %998 = sbr.rel (%p996) target = $region52
        $region51: #{tpu_custom_call.1} parent=39 // pred_region
          %s1000 = ssub.s32 16, 16
          %1001 = vsyncadd %s993, %s1000
          %s1002 = smul.addr %s23, 16
          %s1003 = scalar_lea.hbm %s5, %s1002
          %s1005 = sshll.u32 %s995, 4
          %s1006 = int_to_ptr.vmem [resolvable:$true] %s1005
          %1008 = dma.vmem_to_hbm [thread:$0]  %s1006, 16, %s1003, %s993
        $region52: #{tpu_custom_call.1} parent=39 // pred_fallthru
          _
      $region40: #{tpu_custom_call.1} parent=5 // pred_fallthru
        _
      %p1009 = scmp.le.s32.totalorder 2, %s14
      // Predicated region
      $region53: #{tpu_custom_call.1} parent=5 // pred_check
        %p1010 = pneg %p1009
      $region54: #{tpu_custom_call.1} parent=5 // pred_check_branch
        %1012 = sbr.rel (%p1010) target = $region56
      $region55: #{tpu_custom_call.1} parent=5 // pred_region
        %s1013 = ssub.s32 %s14, 2
        // Predicated region
        $region57: #{tpu_custom_call.1} parent=55 // pred_check
          %p1014 = pneg %p165
        $region58: #{tpu_custom_call.1} parent=55 // pred_check_branch
          %1016 = sbr.rel (%p1014) target = $region60
        $region59: #{tpu_custom_call.1} parent=55 // pred_region
          %s1017 = sand.u32 %s150, 1
          %s1018 = scalar_lea.sflag [#allocation4], %s1017
          %s1019 = sand.u32 %s150, 1
          %s1020 = scalar_lea.vmem [#allocation3], %s1019
          %1021 = dma.done %s1018, 16
        $region60: #{tpu_custom_call.1} parent=55 // pred_fallthru
          _
      $region56: #{tpu_custom_call.1} parent=5 // pred_fallthru
        _
    $region6: #{tpu_custom_call.1} parent=1 // loop_footer
      %s18 = sadd.s32 1, %s14
    $region7: #{tpu_custom_call.1} parent=1 // loop_footer_branch
      %13 = sbr.rel target = $region3
    $region8: #{tpu_custom_call.1} parent=1 // loop_exit
      _
    %1022 = vsyncpa [#allocation4], 1
    %s1023 = scalar_lea.sflag [#allocation4], 1
    %1024 = vsyncpa %s1023, 1

</llo_original>
